<compile_context>
chip_gen: v5e
topology: v5e:2x2
jax: 0.10.0
libtpu: 0.0.40
codegen_flags: <defaults>
</compile_context>

<pallas_src>
import functools

import jax
import jax.numpy as jnp
from jax import lax
from jax.experimental import pallas as pl
from jax.experimental.pallas import tpu as pltpu


# --------------------------------------------------------------------------- kernel


def _mlp_partial(x, wg, wu, wd, j, *, ti, inter, mask_tail):
    """Partial MLP contribution of one intermediate tile.

    x:  (tm, H)   activation rows
    wg: (ti, H)   gate_proj weight tile (native PyTorch (I, H) layout)
    wu: (ti, H)   up_proj weight tile   (native PyTorch (I, H) layout)
    wd: (H, ti)   down_proj weight tile (native PyTorch (H, I) layout)
    Returns the (tm, H) f32 partial of down_proj(SiLU(gate) * up).
    """
    if x.dtype != wg.dtype:
        x = x.astype(wg.dtype)
    dims = (((1,), (1,)), ((), ()))  # contract the shared last dims (x·Wᵀ pattern)
    gate = lax.dot_general(x, wg, dims, preferred_element_type=jnp.float32)  # (tm, ti)
    up = lax.dot_general(x, wu, dims, preferred_element_type=jnp.float32)    # (tm, ti)
    # SiLU(gate) * up in f32; sigmoid rides the EUP slot, muls on the VPU.
    h = (gate * jax.nn.sigmoid(gate)) * up
    if mask_tail:
        # Tail block of a non-divisible intermediate: zero out-of-range columns of h
        # and of the down-proj weight tile (both via select, NaN-safe).
        base = j * ti
        col_h = lax.broadcasted_iota(jnp.int32, h.shape, 1) + base
        h = jnp.where(col_h < inter, h, 0.0)
        col_w = lax.broadcasted_iota(jnp.int32, wd.shape, 1) + base
        wd = jnp.where(col_w < inter, wd, jnp.zeros_like(wd))
    return lax.dot_general(h.astype(wd.dtype), wd, dims,
                           preferred_element_type=jnp.float32)               # (tm, H)


def _mlp_kernel_acc(x_ref, wg_ref, wu_ref, wd_ref, o_ref, acc_ref, *,
                    ti, inter, mask_tail):
    """Multi-step reduction over the intermediate axis (j) with an f32 accumulator."""
    j = pl.program_id(1)

    @pl.when(j == 0)
    def _():
        acc_ref[...] = jnp.zeros_like(acc_ref)

    acc_ref[...] += _mlp_partial(x_ref[...], wg_ref[...], wu_ref[...], wd_ref[...],
                                 j, ti=ti, inter=inter, mask_tail=mask_tail)

    @pl.when(j == pl.num_programs(1) - 1)
    def _():
        o_ref[...] = acc_ref[...].astype(o_ref.dtype)


def _mlp_kernel_direct(x_ref, wg_ref, wu_ref, wd_ref, o_ref, *,
                       ti, inter, mask_tail):
    """Whole intermediate in one tile: no accumulator scratch needed."""
    j = pl.program_id(1)
    o_ref[...] = _mlp_partial(x_ref[...], wg_ref[...], wu_ref[...], wd_ref[...],
                              j, ti=ti, inter=inter, mask_tail=mask_tail
                              ).astype(o_ref.dtype)


# --------------------------------------------------------------------- tile selection


def _vmem_budget():
    """(working-set budget, physical capacity) in bytes, generation aware."""
    cap = 64 * 1024 * 1024  # conservative fallback (v7x per-TensorCore VMEM)
    try:
        info = pltpu.get_tpu_info()
        c = getattr(info, "vmem_capacity_bytes", None)
        if c:
            cap = int(c)
    except Exception:
        pass
    return int(cap * 0.80), cap


def _step_bytes(tm, ti, hidden, x_bytes, w_bytes, o_bytes, with_acc):
    x_b = tm * hidden * x_bytes
    w_b = 3 * hidden * ti * w_bytes          # gate + up + down weight tiles
    o_b = tm * hidden * o_bytes
    acc_b = tm * hidden * 4 if with_acc else 0
    # in/out blocks are double-buffered by the pipeline; the scratch is not.
    return 2 * (x_b + w_b + o_b) + acc_b


def _fit_tm(rows, hidden, ti, x_bytes, w_bytes, o_bytes, with_acc, budget):
    tm = rows if rows <= 1024 else 1024
    while (_step_bytes(tm, ti, hidden, x_bytes, w_bytes, o_bytes, with_acc) > budget
           and tm > 8):
        tm = max(8, tm // 2)
        if tm < rows and tm % 8:
            tm = max(8, (tm // 8) * 8)
    return tm


def _pick_tiles(rows, hidden, inter, x_bytes, w_bytes, o_bytes):
    budget, cap = _vmem_budget()

    # Candidate intermediate tiles, in preference order:
    #   whole intermediate (small I), then 512 / 256 exact divisors (MXU-friendly),
    #   otherwise 512 with a masked tail block (grid = cdiv(I, 512)).
    candidates = []
    if inter <= 1024:
        candidates.append((inter, False))
    for cand_ti in (512, 256):
        if inter > cand_ti and inter % cand_ti == 0:
            candidates.append((cand_ti, False))
    if not candidates:
        candidates.append((512, True))

    target_tm = min(rows, 512)   # keep MXU M-dim full and weight re-streaming low
    chosen = None
    for ti, masked in candidates:
        nj = -(-inter // ti)
        with_acc = nj > 1
        tm = _fit_tm(rows, hidden, ti, x_bytes, w_bytes, o_bytes, with_acc, budget)
        cand = (tm, ti, masked, nj, with_acc)
        if chosen is None or tm > chosen[0]:
            chosen = cand
        if tm >= target_tm:
            chosen = cand
            break

    tm, ti, masked, nj, with_acc = chosen
    used = _step_bytes(tm, ti, hidden, x_bytes, w_bytes, o_bytes, with_acc)
    vmem_limit = int(min(cap * 0.88, max(used * 1.4, 64 * 1024 * 1024)))
    vmem_limit = max(vmem_limit, used + (2 << 20))
    return tm, ti, masked, nj, with_acc, used, budget, vmem_limit


def _weight_spec(shape, index_map, deep):
    """Weight BlockSpec; requests 3-deep buffering for decode-shaped calls."""
    if deep:
        buffered = getattr(pl, "Buffered", None)
        if buffered is not None:
            try:
                return pl.BlockSpec(shape, index_map, pipeline_mode=buffered(3))
            except TypeError:
                pass
    return pl.BlockSpec(shape, index_map)


# ------------------------------------------------------------------------- wrapper


def llama_mlp(x: jax.Array, gate_w: jax.Array, up_w: jax.Array,
              down_w: jax.Array) -> jax.Array:
    """Fused LlamaMLP forward (hidden_act='silu').

    Weights are consumed in their native PyTorch nn.Linear layout (no per-call
    transpose/cast):
      gate_w: (intermediate, hidden)
      up_w:   (intermediate, hidden)
      down_w: (hidden, intermediate)
    """
    orig_shape = x.shape
    hidden = orig_shape[-1]
    inter = gate_w.shape[0]
    rows = 1
    for d in orig_shape[:-1]:
        rows *= d
    x2d = x.reshape(rows, hidden)

    x_bytes = jnp.dtype(x.dtype).itemsize
    w_bytes = jnp.dtype(gate_w.dtype).itemsize
    o_bytes = x_bytes

    tm, ti, mask_tail, nj, with_acc, used, budget, vmem_limit = _pick_tiles(
        rows, hidden, inter, x_bytes, w_bytes, o_bytes)

    n_row_tiles = -(-rows // tm)
    grid = (n_row_tiles, nj)

    # Deeper weight buffering only helps decode-shaped calls (tiny per-step compute,
    # many weight tiles) and only if the extra buffer fits the budget.
    extra_buf = 3 * hidden * ti * w_bytes
    deep = (rows <= 64) and (n_row_tiles * nj >= 4) and (used + extra_buf <= budget)

    if with_acc:
        kernel = functools.partial(_mlp_kernel_acc, ti=ti, inter=inter,
                                   mask_tail=mask_tail)
        scratch = [pltpu.VMEM((tm, hidden), jnp.float32)]
    else:
        kernel = functools.partial(_mlp_kernel_direct, ti=ti, inter=inter,
                                   mask_tail=mask_tail)
        scratch = []

    cost = pl.CostEstimate(
        flops=6 * rows * hidden * inter,             # three matmuls, 2*M*K*N each
        transcendentals=rows * inter,                # sigmoid in SiLU
        bytes_accessed=(rows * hidden * (x_bytes + o_bytes)
                        + 3 * hidden * inter * w_bytes * n_row_tiles),
    )

    out = pl.pallas_call(
        kernel,
        out_shape=jax.ShapeDtypeStruct((rows, hidden), x.dtype),
        grid_spec=pltpu.PrefetchScalarGridSpec(
            num_scalar_prefetch=0,
            grid=grid,
            in_specs=[
                pl.BlockSpec((tm, hidden), lambda m, j: (m, 0)),        # x rows
                _weight_spec((ti, hidden), lambda m, j: (j, 0), deep),  # gate_w (I,H)
                _weight_spec((ti, hidden), lambda m, j: (j, 0), deep),  # up_w (I,H)
                _weight_spec((hidden, ti), lambda m, j: (0, j), deep),  # down_w (H,I)
            ],
            out_specs=pl.BlockSpec((tm, hidden), lambda m, j: (m, 0)),
            scratch_shapes=scratch,
        ),
        compiler_params=pltpu.CompilerParams(
            dimension_semantics=("parallel", "arbitrary"),
            vmem_limit_bytes=vmem_limit,
        ),
        cost_estimate=cost,
    )(x2d, gate_w, up_w, down_w)

    return out.reshape(orig_shape)


def _llama_mlp_ref(x, gate_w, up_w, down_w):
    """Pure-JAX reference mirroring the PyTorch forward exactly (hidden_act='silu')."""
    g = jnp.dot(x, gate_w.T)
    u = jnp.dot(x, up_w.T)
    h = (g * jax.nn.sigmoid(g)) * u
    return jnp.dot(h, down_w.T).astype(x.dtype)


if __name__ == "__main__":
    key = jax.random.PRNGKey(0)
    batch, seq, hidden, intermediate = 2, 8, 32, 64
    kx, kg, ku, kd = jax.random.split(key, 4)

    x = jax.random.normal(kx, (batch, seq, hidden), dtype=jnp.float32)
    # Deterministic small-magnitude weights in PyTorch nn.Linear layout.
    gate_w = jax.random.normal(kg, (intermediate, hidden), dtype=jnp.float32) * 0.2
    up_w = jax.random.normal(ku, (intermediate, hidden), dtype=jnp.float32) * 0.2
    down_w = jax.random.normal(kd, (hidden, intermediate), dtype=jnp.float32) * 0.2

    out = llama_mlp(x, gate_w, up_w, down_w)
    out = jax.block_until_ready(out)

    ref = _llama_mlp_ref(x, gate_w, up_w, down_w)
    assert out.shape == x.shape and out.dtype == x.dtype
    max_err = float(jnp.max(jnp.abs(out - ref)))
    assert jnp.allclose(out, ref, atol=5e-2, rtol=5e-2), (
        f"mismatch vs reference (max abs err {max_err})")

    print("KERNEL_OK")
</pallas_src>

<mosaic_0001>
module attributes {stable_mosaic.version = 11 : i64} {
  func.func @_mlp_kernel_direct(%arg0: i32, %arg1: i32, %arg2: memref<16x32xf32, #tpu.memory_space<vmem>>, %arg3: memref<64x32xf32, #tpu.memory_space<vmem>>, %arg4: memref<64x32xf32, #tpu.memory_space<vmem>>, %arg5: memref<32x64xf32, #tpu.memory_space<vmem>>, %arg6: memref<16x32xf32, #tpu.memory_space<vmem>>) attributes {dimension_semantics = [#tpu.dimension_semantics<parallel>, #tpu.dimension_semantics<arbitrary>], iteration_bounds = array<i64: 1, 1>, scalar_prefetch = 0 : i64, scratch_operands = 0 : i64, tpu.core_type = #tpu.core_type<tc>, window_params = [{transform_indices = @transform_0, window_bounds = array<i64: 16, 32>}, {transform_indices = @transform_1, window_bounds = array<i64: 64, 32>}, {transform_indices = @transform_2, window_bounds = array<i64: 64, 32>}, {transform_indices = @transform_3, window_bounds = array<i64: 32, 64>}, {transform_indices = @transform_4, window_bounds = array<i64: 16, 32>}]} {
    %c0 = arith.constant 0 : index
    %c0_0 = arith.constant 0 : index
    %0 = vector.load %arg2[%c0, %c0_0] : memref<16x32xf32, #tpu.memory_space<vmem>>, vector<16x32xf32>
    %c0_1 = arith.constant 0 : index
    %c0_2 = arith.constant 0 : index
    %1 = vector.load %arg3[%c0_1, %c0_2] : memref<64x32xf32, #tpu.memory_space<vmem>>, vector<64x32xf32>
    %c0_3 = arith.constant 0 : index
    %c0_4 = arith.constant 0 : index
    %2 = vector.load %arg4[%c0_3, %c0_4] : memref<64x32xf32, #tpu.memory_space<vmem>>, vector<64x32xf32>
    %c0_5 = arith.constant 0 : index
    %c0_6 = arith.constant 0 : index
    %3 = vector.load %arg5[%c0_5, %c0_6] : memref<32x64xf32, #tpu.memory_space<vmem>>, vector<32x64xf32>
    %cst = arith.constant dense<0.000000e+00> : vector<16x64xf32>
    %4 = tpu.matmul %0, %1, %cst {dimension_numbers = #tpu.dot_dimension_numbers<[1], [1], [0], [0], [0, 0, 1, 0], [], []>} : vector<16x32xf32>, vector<64x32xf32>, vector<16x64xf32> -> vector<16x64xf32>
    %cst_7 = arith.constant dense<0.000000e+00> : vector<16x64xf32>
    %5 = tpu.matmul %0, %2, %cst_7 {dimension_numbers = #tpu.dot_dimension_numbers<[1], [1], [0], [0], [0, 0, 1, 0], [], []>} : vector<16x32xf32>, vector<64x32xf32>, vector<16x64xf32> -> vector<16x64xf32>
    %6 = arith.negf %4 : vector<16x64xf32>
    %7 = math.exp %6 : vector<16x64xf32>
    %cst_8 = arith.constant 1.000000e+00 : f32
    %8 = vector.broadcast %cst_8 : f32 to vector<16x64xf32>
    %9 = arith.addf %8, %7 : vector<16x64xf32>
    %10 = arith.divf %8, %9 : vector<16x64xf32>
    %11 = arith.mulf %4, %10 : vector<16x64xf32>
    %12 = arith.mulf %11, %5 : vector<16x64xf32>
    %cst_9 = arith.constant dense<0.000000e+00> : vector<16x32xf32>
    %13 = tpu.matmul %12, %3, %cst_9 {dimension_numbers = #tpu.dot_dimension_numbers<[1], [1], [0], [0], [0, 0, 1, 0], [], []>} : vector<16x64xf32>, vector<32x64xf32>, vector<16x32xf32> -> vector<16x32xf32>
    %c0_10 = arith.constant 0 : index
    %c0_11 = arith.constant 0 : index
    %14 = vector.load %arg6[%c0_10, %c0_11] : memref<16x32xf32, #tpu.memory_space<vmem>>, vector<16x32xf32>
    tpu.vector_store %arg6[%c0_10, %c0_11], %13 {strides = array<i32>} : memref<16x32xf32, #tpu.memory_space<vmem>>, vector<16x32xf32>,
    return
  }
  func.func @transform_0(%arg0: i32, %arg1: i32) -> (i32, i32) {
    %c0_i32 = arith.constant 0 : i32
    %c0_i32_0 = arith.constant 0 : i32
    return %arg0, %c0_i32 : i32, i32
  }
  func.func @transform_1(%arg0: i32, %arg1: i32) -> (i32, i32) {
    %c0_i32 = arith.constant 0 : i32
    %c0_i32_0 = arith.constant 0 : i32
    return %arg1, %c0_i32 : i32, i32
  }
  func.func @transform_2(%arg0: i32, %arg1: i32) -> (i32, i32) {
    %c0_i32 = arith.constant 0 : i32
    %c0_i32_0 = arith.constant 0 : i32
    return %arg1, %c0_i32 : i32, i32
  }
  func.func @transform_3(%arg0: i32, %arg1: i32) -> (i32, i32) {
    %c0_i32 = arith.constant 0 : i32
    %c0_i32_0 = arith.constant 0 : i32
    return %c0_i32, %arg1 : i32, i32
  }
  func.func @transform_4(%arg0: i32, %arg1: i32) -> (i32, i32) {
    %c0_i32 = arith.constant 0 : i32
    %c0_i32_0 = arith.constant 0 : i32
    return %arg0, %c0_i32 : i32, i32
  }
}

</mosaic_0001>

<llo_original>
// kernel: tpu_custom_call.1
$region0: #{tpu_custom_call.1}
  #allocation0 [shape = 'u32[]', space=smem, size = 0x4, offset = 0x4, fixed_abs, tag = 'smem constant byte address 0x4 - core index']
  #allocation1 [shape = 'u32[72,128]{1,0:T(1,128)}', space=vmem, size = 0x9000, scoped, tag = 'internal scratch']
  %s0 = inlined_call_operand.vmem [shape: f32[16,32], index: 0, kind: input, shape index: {}]
  %s1 = inlined_call_operand.vmem [shape: f32[64,32], index: 1, kind: input, shape index: {}]
  %s2 = inlined_call_operand.vmem [shape: f32[64,32], index: 2, kind: input, shape index: {}]
  %s3 = inlined_call_operand.vmem [shape: f32[32,64], index: 3, kind: input, shape index: {}]
  %s4 = inlined_call_operand.hbm [shape: f32[16,32], index: 4, kind: output, shape index: {}]
  %s5 = sld [smem:[#allocation0]]
  $region26: #{tpu_custom_call.1} parent=0
    _
  %s7 = ssub.s32 1, %s5
  %s8 = scalar_select 0, %s7, %s5
  $region1: #{tpu_custom_call.1} parent=0
    #allocation2 [shape = 'u8[8192]{0}', space=vmem, size = 0x2000, scoped, tag = 'output window, operand 0, single buffered']
    #allocation3 [shape = 's32[1]{0}', space=sflag, size = 0x4, scoped, tag = 'scoped memory for tpu_custom_call.1']
    %9 = vsyncpa [#allocation3], 0
    // Predicated region
    $region2: #{tpu_custom_call.1} parent=1 // pred_check
      _
    $region3: #{tpu_custom_call.1} parent=1 // pred_check_branch
      %11 = sbr.rel (0) target = $region5
    $region4: #{tpu_custom_call.1} parent=1 // pred_region
      _
    $region5: #{tpu_custom_call.1} parent=1 // pred_fallthru
      _
    // Predicated region
    $region6: #{tpu_custom_call.1} parent=1 // pred_check
      _
    $region7: #{tpu_custom_call.1} parent=1 // pred_check_branch
      %13 = sbr.rel (0) target = $region9
    $region8: #{tpu_custom_call.1} parent=1 // pred_region
      _
    $region9: #{tpu_custom_call.1} parent=1 // pred_fallthru
      _
    // Predicated region
    $region10: #{tpu_custom_call.1} parent=1 // pred_check
      _
    $region11: #{tpu_custom_call.1} parent=1 // pred_check_branch
      %15 = sbr.rel (0) target = $region13
    $region12: #{tpu_custom_call.1} parent=1 // pred_region
      _
    $region13: #{tpu_custom_call.1} parent=1 // pred_fallthru
      _
    // Predicated region
    $region14: #{tpu_custom_call.1} parent=1 // pred_check
      _
    $region15: #{tpu_custom_call.1} parent=1 // pred_check_branch
      %17 = sbr.rel (0) target = $region17
    $region16: #{tpu_custom_call.1} parent=1 // pred_region
      _
    $region17: #{tpu_custom_call.1} parent=1 // pred_fallthru
      _
    %v18 = vld [vmem:[%s0] sm:$0xff]
    %v19 = vld [vmem:[%s0 + $0x8] sm:$0xff]
    %v20 = vld [vmem:[%s1] sm:$0xff]
    %v21 = vld [vmem:[%s1 + $0x8] sm:$0xff]
    %v22 = vld [vmem:[%s1 + $0x10] sm:$0xff]
    %v23 = vld [vmem:[%s1 + $0x18] sm:$0xff]
    %v24 = vld [vmem:[%s1 + $0x20] sm:$0xff]
    %v25 = vld [vmem:[%s1 + $0x28] sm:$0xff]
    %v26 = vld [vmem:[%s1 + $0x30] sm:$0xff]
    %v27 = vld [vmem:[%s1 + $0x38] sm:$0xff]
    %v28 = vld [vmem:[%s2] sm:$0xff]
    %v29 = vld [vmem:[%s2 + $0x8] sm:$0xff]
    %v30 = vld [vmem:[%s2 + $0x10] sm:$0xff]
    %v31 = vld [vmem:[%s2 + $0x18] sm:$0xff]
    %v32 = vld [vmem:[%s2 + $0x20] sm:$0xff]
    %v33 = vld [vmem:[%s2 + $0x28] sm:$0xff]
    %v34 = vld [vmem:[%s2 + $0x30] sm:$0xff]
    %v35 = vld [vmem:[%s2 + $0x38] sm:$0xff]
    %v36 = vld [vmem:[%s3] sm:$0xff]
    %v37 = vld [vmem:[%s3 + $0x8] sm:$0xff]
    %v38 = vld [vmem:[%s3 + $0x10] sm:$0xff]
    %v39 = vld [vmem:[%s3 + $0x18] sm:$0xff]
    %vm40 = vcmask 261120
    %v42 = vsel %vm40, %v18, 0
    %v45 = vsel %vm40, %v19, 0
    %v48 = vsel %vm40, %v20, 0
    %v51 = vsel %vm40, %v21, 0
    %v54 = vsel %vm40, %v22, 0
    %v57 = vsel %vm40, %v23, 0
    %v60 = vsel %vm40, %v24, 0
    %v63 = vsel %vm40, %v25, 0
    %v66 = vsel %vm40, %v26, 0
    %v69 = vsel %vm40, %v27, 0
    %71 = vmatpush.xpose.msra.mxu0 0.0
    %72 = vmatpush.xpose.msra.mxu0 0.0
    %73 = vmatpush.xpose.msra.mxu0 0.0
    %74 = vmatpush.xpose.msra.mxu0 0.0
    %75 = vmatpush.xpose.msra.mxu0 0.0
    %76 = vmatpush.xpose.msra.mxu0 0.0
    %77 = vmatpush.xpose.msra.mxu0 0.0
    %78 = vmatpush.xpose.msra.mxu0 0.0
    %79 = vmatpush.xpose.msra.mxu0 %v69
    %80 = vmatpush.xpose.msra.mxu0 %v66
    %81 = vmatpush.xpose.msra.mxu0 %v63
    %82 = vmatpush.xpose.msra.mxu0 %v60
    %83 = vmatpush.xpose.msra.mxu0 %v57
    %84 = vmatpush.xpose.msra.mxu0 %v54
    %85 = vmatpush.xpose.msra.mxu0 %v51
    %86 = vmatpush.xpose.msra.mxu0 %v48
    %87 = vmatmul.f32.gmra.mxu0 %v42
    %v88 = vpop.f32.mrf.mxu0
    %v89 = vadd.f32 0.0, %v88
    %90 = vmatmul.f32.gmra.mxu0 %v45
    %v91 = vpop.f32.mrf.mxu0
    %v92 = vadd.f32 0.0, %v91
    %93 = vdwg.mxu0
    %v95 = vsel %vm40, %v28, 0
    %v98 = vsel %vm40, %v29, 0
    %v101 = vsel %vm40, %v30, 0
    %v104 = vsel %vm40, %v31, 0
    %v107 = vsel %vm40, %v32, 0
    %v110 = vsel %vm40, %v33, 0
    %v113 = vsel %vm40, %v34, 0
    %v116 = vsel %vm40, %v35, 0
    %118 = vmatpush.xpose.msra.mxu0 0.0
    %119 = vmatpush.xpose.msra.mxu0 0.0
    %120 = vmatpush.xpose.msra.mxu0 0.0
    %121 = vmatpush.xpose.msra.mxu0 0.0
    %122 = vmatpush.xpose.msra.mxu0 0.0
    %123 = vmatpush.xpose.msra.mxu0 0.0
    %124 = vmatpush.xpose.msra.mxu0 0.0
    %125 = vmatpush.xpose.msra.mxu0 0.0
    %126 = vmatpush.xpose.msra.mxu0 %v116
    %127 = vmatpush.xpose.msra.mxu0 %v113
    %128 = vmatpush.xpose.msra.mxu0 %v110
    %129 = vmatpush.xpose.msra.mxu0 %v107
    %130 = vmatpush.xpose.msra.mxu0 %v104
    %131 = vmatpush.xpose.msra.mxu0 %v101
    %132 = vmatpush.xpose.msra.mxu0 %v98
    %133 = vmatpush.xpose.msra.mxu0 %v95
    %134 = vmatmul.f32.gmra.mxu0 %v42
    %v135 = vpop.f32.mrf.mxu0
    %v136 = vadd.f32 0.0, %v135
    %137 = vmatmul.f32.gmra.mxu0 %v45
    %v138 = vpop.f32.mrf.mxu0
    %v139 = vadd.f32 0.0, %v138
    %140 = vdwg.mxu0
    %v141 = vxor.u32 %v89, 2147483648
    %v142 = vxor.u32 %v92, 2147483648
    %v143 = vmul.f32 %v141, 1.442695
    %v144 = vpow.pop %v143
    %v145 = vmul.f32 %v142, 1.442695
    %v146 = vpow.pop %v145
    %v147 = vadd.f32 %v144, 1.0
    %v148 = vadd.f32 %v146, 1.0
    %v149 = vrcp.pop %v147
    %v150 = vmul.f32 %v147, %v149
    %v151 = vsub.f32 1.0, %v150
    %v152 = vmul.f32 %v149, %v151
    %v153 = vadd.f32 %v149, %v152
    %vm154 = vweird.f32 %v147
    %vm155 = vweird.f32 %v149
    %vm156 = vmor %vm154, %vm155
    %v157 = vsel %vm156, %v149, %v153
    %v158 = vand.u32 2147483647, %v147
    %vm159 = vcmp.eq.f32.partialorder %v158, 8.507059e+37
    %v160 = vand.u32 %v147, 2147483648
    %v161 = vor.u32 1.1754944e-38, %v160
    %v162 = vsel %vm159, %v161, %v157
    %v163 = vmul.f32 1.0, %v162
    %v164 = vrcp.pop %v148
    %v165 = vmul.f32 %v148, %v164
    %v166 = vsub.f32 1.0, %v165
    %v167 = vmul.f32 %v164, %v166
    %v168 = vadd.f32 %v164, %v167
    %vm169 = vweird.f32 %v148
    %vm170 = vweird.f32 %v164
    %vm171 = vmor %vm169, %vm170
    %v172 = vsel %vm171, %v164, %v168
    %v173 = vand.u32 2147483647, %v148
    %vm174 = vcmp.eq.f32.partialorder %v173, 8.507059e+37
    %v175 = vand.u32 %v148, 2147483648
    %v176 = vor.u32 1.1754944e-38, %v175
    %v177 = vsel %vm174, %v176, %v172
    %v178 = vmul.f32 1.0, %v177
    %v179 = vmul.f32 %v89, %v163
    %v180 = vmul.f32 %v92, %v178
    %v181 = vmul.f32 %v179, %v136
    %v182 = vmul.f32 %v180, %v139
    %vm183 = vcmask 523264
    %v185 = vsel %vm183, %v181, 0
    %v188 = vsel %vm183, %v182, 0
    %v191 = vsel %vm183, %v36, 0
    %v194 = vsel %vm183, %v37, 0
    %v197 = vsel %vm183, %v38, 0
    %v200 = vsel %vm183, %v39, 0
    %202 = vmatpush.xpose.msra.mxu0 0.0
    %203 = vmatpush.xpose.msra.mxu0 0.0
    %204 = vmatpush.xpose.msra.mxu0 0.0
    %205 = vmatpush.xpose.msra.mxu0 0.0
    %206 = vmatpush.xpose.msra.mxu0 0.0
    %207 = vmatpush.xpose.msra.mxu0 0.0
    %208 = vmatpush.xpose.msra.mxu0 0.0
    %209 = vmatpush.xpose.msra.mxu0 0.0
    %210 = vmatpush.xpose.msra.mxu0 0.0
    %211 = vmatpush.xpose.msra.mxu0 0.0
    %212 = vmatpush.xpose.msra.mxu0 0.0
    %213 = vmatpush.xpose.msra.mxu0 0.0
    %214 = vmatpush.xpose.msra.mxu0 %v200
    %215 = vmatpush.xpose.msra.mxu0 %v197
    %216 = vmatpush.xpose.msra.mxu0 %v194
    %217 = vmatpush.xpose.msra.mxu0 %v191
    %218 = vmatmul.f32.gmra.mxu0 %v185
    %v219 = vpop.f32.mrf.mxu0
    %v220 = vadd.f32 0.0, %v219
    %221 = vmatmul.f32.gmra.mxu0 %v188
    %v222 = vpop.f32.mrf.mxu0
    %v223 = vadd.f32 0.0, %v222
    %224 = vdwg.mxu0
    %225 = vst.msk [vmem:[#allocation2] sm:$0xff] %vm40, %v220
    %226 = vst.msk [vmem:[#allocation2 + $0x8] sm:$0xff] %vm40, %v223
    // Predicated region
    $region18: #{tpu_custom_call.1} parent=1 // pred_check
      _
    $region19: #{tpu_custom_call.1} parent=1 // pred_check_branch
      %228 = sbr.rel (0) target = $region21
    $region20: #{tpu_custom_call.1} parent=1 // pred_region
      %230 = vsyncadd [#allocation3], 0
      %s231 = sshll.u32 [#allocation2], 4
      %s232 = int_to_ptr.vmem [resolvable:$true] %s231
      %s233 = sshll.u32 %s4, 4
      %s234 = int_to_ptr.hbm [resolvable:$true] %s233
      %239 = dma.vmem_to_hbm [thread:$0]  %s232, 256, %s234, [#allocation3], 128, 128, 8
    $region21: #{tpu_custom_call.1} parent=1 // pred_fallthru
      _
    // Predicated region
    $region22: #{tpu_custom_call.1} parent=1 // pred_check
      _
    $region23: #{tpu_custom_call.1} parent=1 // pred_check_branch
      %241 = sbr.rel (0) target = $region25
    $region24: #{tpu_custom_call.1} parent=1 // pred_region
      %243 = dma.done [#allocation3], 256
    $region25: #{tpu_custom_call.1} parent=1 // pred_fallthru
      _
    %244 = vsyncpa [#allocation3], 1

</llo_original>
